<compile_context>
chip_gen: v5e
topology: v5e:2x2
jax: 0.10.0
libtpu: 0.0.40
codegen_flags: <defaults>
</compile_context>

<pallas_src>
import jax
import jax.numpy as jnp
from jax.experimental import pallas as pl
from jax.experimental.pallas import tpu as pltpu

IC = 4    # input_channels
HC = 32   # hidden_channels
B = 8     # batch (demo size)

_F32_BIG = float(jnp.finfo(jnp.float32).max)


def converter_kernel(z_ref, w_ref, b_ref, lo_ref, hi_ref, out_ref):
    # z_ref:   (TB, IC+HC)  z tile (features on the lane axis)
    # w_ref:   (IC+HC, HC)  concat([Wx, Wh], axis=0), resident across grid steps
    # b_ref:   (1, HC)      bias, resident
    # lo_ref:  (1, IC+HC)   per-lane lower bound (-1 on hidden lanes, -FLT_MAX on input lanes)
    # hi_ref:  (1, IC+HC)   per-lane upper bound (+1 on hidden lanes, +FLT_MAX on input lanes)
    # out_ref: (TB, HC)     model_out (lane-dense)
    z = z_ref[...]
    # Per-lane clamp: hidden lanes hit [-1, 1]; input lanes pass through
    # (their bounds are +/-FLT_MAX).  Two VALU ops, no compare/select/iota.
    zc = jnp.minimum(jnp.maximum(z, lo_ref[...]), hi_ref[...])
    # Single fused MXU op: [x | clip(h)] @ [Wx ; Wh] + b == x@Wx + clip(h)@Wh + b
    pre = jnp.dot(zc, w_ref[...], preferred_element_type=jnp.float32) + b_ref[...]
    out_ref[...] = jnp.tanh(pre).astype(out_ref.dtype)


def _choose_tiling(batch, tb_default):
    """Pick (tb, n_tiles, padded_rows).

    * rows are padded to the f32 sublane tile (8);
    * tiles are large (default 1024 rows) to amortize per-step overhead;
    * when the batch is big enough to split, the tile count is kept even and
      >= 2 so the "parallel" grid axis shards across both v7x TensorCores.
    """
    padded8 = max(8, ((batch + 7) // 8) * 8)
    if padded8 <= tb_default:
        # Medium batch: split into two even tiles once each half is >= 128 rows
        # (worth it only to feed both v7x TCs); otherwise a single tile.
        if padded8 >= 256 and padded8 % 16 == 0:
            return padded8 // 2, 2, padded8
        return padded8, 1, padded8
    tb = tb_default
    n_tiles = -(-padded8 // tb)
    if n_tiles % 2:
        n_tiles += 1  # even tile count -> balanced across the two v7x TCs
    return tb, n_tiles, n_tiles * tb


def continuous_rnn_converter(z, wx, wh, b, out_base, *, tb=1024):
    """Full ContinuousRNNConverter forward.

    The kernel computes only model_out (lane-dense); the static identity block
    and the column-0 placement are assembled here in a single pad/concat pass,
    matching the PyTorch semantics:
        out[..., :IC, :IC] = I ; out[..., IC:, 0] = model_out.
    Supports arbitrary leading batch dims (flattened for the kernel).
    """
    *batch_dims, width = z.shape
    assert width == IC + HC
    batch = 1
    for d in batch_dims:
        batch *= d
    z2 = z.reshape(batch, width)

    # Fused weight + per-lane clamp bounds (built once, outside the kernel).
    w_cat = jnp.concatenate([wx, wh], axis=0)                       # (IC+HC, HC)
    lane = jnp.arange(IC + HC)
    lo = jnp.where(lane >= IC, -1.0, -_F32_BIG).astype(jnp.float32).reshape(1, IC + HC)
    hi = jnp.where(lane >= IC, 1.0, _F32_BIG).astype(jnp.float32).reshape(1, IC + HC)

    tb, n_tiles, padded = _choose_tiling(batch, tb)
    if padded != batch:
        z_in = jnp.zeros((padded, width), z2.dtype).at[:batch].set(z2)
    else:
        z_in = z2

    model_out = pl.pallas_call(
        converter_kernel,
        out_shape=jax.ShapeDtypeStruct((padded, HC), jnp.float32),
        grid=(n_tiles,),
        in_specs=[
            pl.BlockSpec((tb, IC + HC), lambda i: (i, 0)),          # z tile
            pl.BlockSpec((IC + HC, HC), lambda i: (0, 0)),          # W_cat (resident)
            pl.BlockSpec((1, HC), lambda i: (0, 0)),                # bias  (resident)
            pl.BlockSpec((1, IC + HC), lambda i: (0, 0)),           # lo    (resident)
            pl.BlockSpec((1, IC + HC), lambda i: (0, 0)),           # hi    (resident)
        ],
        out_specs=pl.BlockSpec((tb, HC), lambda i: (i, 0)),
        compiler_params=pltpu.CompilerParams(
            dimension_semantics=("parallel",)),
    )(z_in, w_cat, b, lo, hi)[:batch]

    # Single-pass epilogue (no broadcast-then-scatter over the full slab):
    #   rows [:IC]  -> out_base identity block, broadcast over batch
    #   rows [IC:]  -> column 0 = model_out, columns 1: = out_base[IC:, 1:] (zeros)
    top = jnp.broadcast_to(out_base[None, :IC, :], (batch, IC, IC))
    bottom_rest = jnp.broadcast_to(out_base[None, IC:, 1:], (batch, HC, IC - 1))
    bottom = jnp.concatenate([model_out[:, :, None], bottom_rest], axis=-1)
    out = jnp.concatenate([top, bottom], axis=1)
    return out.reshape(*batch_dims, IC + HC, IC)


def reference(z, wx, wh, b, out_base):
    x = z[:, :IC]
    h = jnp.clip(z[:, IC:], -1.0, 1.0)
    mo = jnp.tanh(x @ wx + h @ wh + b)
    out = jnp.broadcast_to(out_base, (z.shape[0], IC + HC, IC))
    out = out.at[:, IC:, 0].set(mo)
    return out


if __name__ == "__main__":
    key = jax.random.PRNGKey(0)
    kz, kwx, kwh, kb = jax.random.split(key, 4)

    # inputs / deterministic parameters
    z = jax.random.normal(kz, (B, IC + HC), dtype=jnp.float32) * 2.0
    wx = jax.random.normal(kwx, (IC, HC), dtype=jnp.float32) * 0.1
    wh = jax.random.normal(kwh, (HC, HC), dtype=jnp.float32) * 0.1
    b = jax.random.normal(kb, (1, HC), dtype=jnp.float32) * 0.1

    # out_base: zeros with identity in the top (IC x IC) block (as in __init__)
    out_base = jnp.zeros((IC + HC, IC), dtype=jnp.float32)
    out_base = out_base.at[jnp.arange(IC), jnp.arange(IC)].set(1.0)

    out = continuous_rnn_converter(z, wx, wh, b, out_base)
    out = jax.block_until_ready(out)

    ref = reference(z, wx, wh, b, out_base)
    assert out.shape == (B, IC + HC, IC)
    assert jnp.allclose(out, ref, atol=1e-5, rtol=1e-5), "mismatch vs reference"

    print("KERNEL_OK")
</pallas_src>

<mosaic_0001>
module attributes {stable_mosaic.version = 11 : i64} {
  func.func @converter_kernel(%arg0: i32, %arg1: memref<8x36xf32, #tpu.memory_space<vmem>>, %arg2: memref<36x32xf32, #tpu.memory_space<vmem>>, %arg3: memref<1x32xf32, #tpu.memory_space<vmem>>, %arg4: memref<1x36xf32, #tpu.memory_space<vmem>>, %arg5: memref<1x36xf32, #tpu.memory_space<vmem>>, %arg6: memref<8x32xf32, #tpu.memory_space<vmem>>) attributes {dimension_semantics = [#tpu.dimension_semantics<parallel>], iteration_bounds = array<i64: 1>, scalar_prefetch = 0 : i64, scratch_operands = 0 : i64, tpu.core_type = #tpu.core_type<tc>, window_params = [{transform_indices = @transform_0, window_bounds = array<i64: 8, 36>}, {pipeline_mode = #tpu.pipeline_mode<synchronous>, transform_indices = @transform_1, window_bounds = array<i64: 36, 32>}, {pipeline_mode = #tpu.pipeline_mode<synchronous>, transform_indices = @transform_2, window_bounds = array<i64: 1, 32>}, {pipeline_mode = #tpu.pipeline_mode<synchronous>, transform_indices = @transform_3, window_bounds = array<i64: 1, 36>}, {pipeline_mode = #tpu.pipeline_mode<synchronous>, transform_indices = @transform_4, window_bounds = array<i64: 1, 36>}, {transform_indices = @transform_5, window_bounds = array<i64: 8, 32>}]} {
    %c0 = arith.constant 0 : index
    %c0_0 = arith.constant 0 : index
    %0 = vector.load %arg1[%c0, %c0_0] : memref<8x36xf32, #tpu.memory_space<vmem>>, vector<8x36xf32>
    %c0_1 = arith.constant 0 : index
    %c0_2 = arith.constant 0 : index
    %1 = vector.load %arg4[%c0_1, %c0_2] : memref<1x36xf32, #tpu.memory_space<vmem>>, vector<1x36xf32>
    %2 = vector.broadcast %1 : vector<1x36xf32> to vector<8x36xf32>
    %3 = arith.maximumf %0, %2 : vector<8x36xf32>
    %c0_3 = arith.constant 0 : index
    %c0_4 = arith.constant 0 : index
    %4 = vector.load %arg5[%c0_3, %c0_4] : memref<1x36xf32, #tpu.memory_space<vmem>>, vector<1x36xf32>
    %5 = vector.broadcast %4 : vector<1x36xf32> to vector<8x36xf32>
    %6 = arith.minimumf %3, %5 : vector<8x36xf32>
    %c0_5 = arith.constant 0 : index
    %c0_6 = arith.constant 0 : index
    %7 = vector.load %arg2[%c0_5, %c0_6] : memref<36x32xf32, #tpu.memory_space<vmem>>, vector<36x32xf32>
    %cst = arith.constant dense<0.000000e+00> : vector<8x32xf32>
    %8 = tpu.matmul %6, %7, %cst {dimension_numbers = #tpu.dot_dimension_numbers<[1], [0], [0], [1], [0, 0, 1, 1], [], []>} : vector<8x36xf32>, vector<36x32xf32>, vector<8x32xf32> -> vector<8x32xf32>
    %c0_7 = arith.constant 0 : index
    %c0_8 = arith.constant 0 : index
    %9 = vector.load %arg3[%c0_7, %c0_8] : memref<1x32xf32, #tpu.memory_space<vmem>>, vector<1x32xf32>
    %10 = vector.broadcast %9 : vector<1x32xf32> to vector<8x32xf32>
    %11 = arith.addf %8, %10 : vector<8x32xf32>
    %12 = math.tanh %11 : vector<8x32xf32>
    %c0_9 = arith.constant 0 : index
    %c0_10 = arith.constant 0 : index
    %13 = vector.load %arg6[%c0_9, %c0_10] : memref<8x32xf32, #tpu.memory_space<vmem>>, vector<8x32xf32>
    tpu.vector_store %arg6[%c0_9, %c0_10], %12 {strides = array<i32>} : memref<8x32xf32, #tpu.memory_space<vmem>>, vector<8x32xf32>,
    return
  }
  func.func @transform_0(%arg0: i32) -> (i32, i32) {
    %c0_i32 = arith.constant 0 : i32
    %c0_i32_0 = arith.constant 0 : i32
    return %arg0, %c0_i32 : i32, i32
  }
  func.func @transform_1(%arg0: i32) -> (i32, i32) {
    %c0_i32 = arith.constant 0 : i32
    %c0_i32_0 = arith.constant 0 : i32
    %c0_i32_1 = arith.constant 0 : i32
    return %c0_i32, %c0_i32_0 : i32, i32
  }
  func.func @transform_2(%arg0: i32) -> (i32, i32) {
    %c0_i32 = arith.constant 0 : i32
    %c0_i32_0 = arith.constant 0 : i32
    %c0_i32_1 = arith.constant 0 : i32
    return %c0_i32, %c0_i32_0 : i32, i32
  }
  func.func @transform_3(%arg0: i32) -> (i32, i32) {
    %c0_i32 = arith.constant 0 : i32
    %c0_i32_0 = arith.constant 0 : i32
    %c0_i32_1 = arith.constant 0 : i32
    return %c0_i32, %c0_i32_0 : i32, i32
  }
  func.func @transform_4(%arg0: i32) -> (i32, i32) {
    %c0_i32 = arith.constant 0 : i32
    %c0_i32_0 = arith.constant 0 : i32
    %c0_i32_1 = arith.constant 0 : i32
    return %c0_i32, %c0_i32_0 : i32, i32
  }
  func.func @transform_5(%arg0: i32) -> (i32, i32) {
    %c0_i32 = arith.constant 0 : i32
    %c0_i32_0 = arith.constant 0 : i32
    return %arg0, %c0_i32 : i32, i32
  }
}

</mosaic_0001>

<llo_original>
// kernel: tpu_custom_call.1
$region0: #{tpu_custom_call.1}
  #allocation0 [shape = 'u32[]', space=smem, size = 0x4, offset = 0x4, fixed_abs, tag = 'smem constant byte address 0x4 - core index']
  #allocation1 [shape = 'u32[72,128]{1,0:T(1,128)}', space=vmem, size = 0x9000, scoped, tag = 'internal scratch']
  %s0 = inlined_call_operand.vmem [shape: f32[8,36], index: 0, kind: input, shape index: {}]
  %s1 = inlined_call_operand.vmem [shape: f32[36,32], index: 1, kind: input, shape index: {}]
  %s2 = inlined_call_operand.vmem [shape: f32[1,32], index: 2, kind: input, shape index: {}]
  %s3 = inlined_call_operand.vmem [shape: f32[1,36], index: 3, kind: input, shape index: {}]
  %s4 = inlined_call_operand.vmem [shape: f32[1,36], index: 4, kind: input, shape index: {}]
  %s5 = inlined_call_operand.hbm [shape: f32[8,32], index: 5, kind: output, shape index: {}]
  %s6 = sld [smem:[#allocation0]]
  $region30: #{tpu_custom_call.1} parent=0
    _
  %s8 = ssub.s32 1, %s6
  %s9 = scalar_select 0, %s8, %s6
  $region1: #{tpu_custom_call.1} parent=0
    #allocation2 [shape = 'u8[4096]{0}', space=vmem, size = 0x1000, scoped, tag = 'output window, operand 0, single buffered']
    #allocation3 [shape = 's32[1]{0}', space=sflag, size = 0x4, scoped, tag = 'scoped memory for tpu_custom_call.1']
    %10 = vsyncpa [#allocation3], 0
    // Predicated region
    $region2: #{tpu_custom_call.1} parent=1 // pred_check
      _
    $region3: #{tpu_custom_call.1} parent=1 // pred_check_branch
      %12 = sbr.rel (0) target = $region5
    $region4: #{tpu_custom_call.1} parent=1 // pred_region
      _
    $region5: #{tpu_custom_call.1} parent=1 // pred_fallthru
      _
    // Predicated region
    $region6: #{tpu_custom_call.1} parent=1 // pred_check
      _
    $region7: #{tpu_custom_call.1} parent=1 // pred_check_branch
      %14 = sbr.rel (0) target = $region9
    $region8: #{tpu_custom_call.1} parent=1 // pred_region
      _
    $region9: #{tpu_custom_call.1} parent=1 // pred_fallthru
      _
    // Predicated region
    $region10: #{tpu_custom_call.1} parent=1 // pred_check
      _
    $region11: #{tpu_custom_call.1} parent=1 // pred_check_branch
      %16 = sbr.rel (0) target = $region13
    $region12: #{tpu_custom_call.1} parent=1 // pred_region
      _
    $region13: #{tpu_custom_call.1} parent=1 // pred_fallthru
      _
    // Predicated region
    $region14: #{tpu_custom_call.1} parent=1 // pred_check
      _
    $region15: #{tpu_custom_call.1} parent=1 // pred_check_branch
      %18 = sbr.rel (0) target = $region17
    $region16: #{tpu_custom_call.1} parent=1 // pred_region
      _
    $region17: #{tpu_custom_call.1} parent=1 // pred_fallthru
      _
    // Predicated region
    $region18: #{tpu_custom_call.1} parent=1 // pred_check
      _
    $region19: #{tpu_custom_call.1} parent=1 // pred_check_branch
      %20 = sbr.rel (0) target = $region21
    $region20: #{tpu_custom_call.1} parent=1 // pred_region
      _
    $region21: #{tpu_custom_call.1} parent=1 // pred_fallthru
      _
    %v21 = vld [vmem:[%s0] sm:$0xff]
    %v22 = vld [vmem:[%s3] sm:$0x1]
    %v24 = vperm.slane %v22, 0
    %v26 = vmax.f32 %v21, %v24
    %v27 = vld [vmem:[%s4] sm:$0x1]
    %v29 = vperm.slane %v27, 0
    %v31 = vmin.f32 %v26, %v29
    %v32 = vld [vmem:[%s1] sm:$0xff]
    %v33 = vld [vmem:[%s1 + $0x8] sm:$0xff]
    %v34 = vld [vmem:[%s1 + $0x10] sm:$0xff]
    %v35 = vld [vmem:[%s1 + $0x18] sm:$0xff]
    %v36 = vld [vmem:[%s1 + $0x20] sm:$0xf]
    %v37 = vld [vmem:[%s2] sm:$0x1]
    %v39 = vperm.slane %v37, 0
    %vm41 = vcmask 293888
    %v43 = vsel %vm41, %v31, 0
    %vm45 = vcmask 1043456
    %v47 = vsel %vm45, %v36, 0
    %49 = vmatpush.msra.mxu0 0.0
    %50 = vmatpush.msra.mxu0 0.0
    %51 = vmatpush.msra.mxu0 0.0
    %52 = vmatpush.msra.mxu0 0.0
    %53 = vmatpush.msra.mxu0 0.0
    %54 = vmatpush.msra.mxu0 0.0
    %55 = vmatpush.msra.mxu0 0.0
    %56 = vmatpush.msra.mxu0 0.0
    %57 = vmatpush.msra.mxu0 0.0
    %58 = vmatpush.msra.mxu0 0.0
    %59 = vmatpush.msra.mxu0 0.0
    %60 = vmatpush.msra.mxu0 %v47
    %61 = vmatpush.msra.mxu0 %v35
    %62 = vmatpush.msra.mxu0 %v34
    %63 = vmatpush.msra.mxu0 %v33
    %64 = vmatpush.msra.mxu0 %v32
    %65 = vmatmul.f32.gmra.mxu0 %v43
    %v66 = vpop.f32.mrf.mxu0
    %v67 = vadd.f32 %v39, %v66
    %68 = vdwg.mxu0
    %v69 = vtanh.pop %v67
    %vm70 = vcmask 261120
    %71 = vst.msk [vmem:[#allocation2] sm:$0xff] %vm70, %v69
    // Predicated region
    $region22: #{tpu_custom_call.1} parent=1 // pred_check
      _
    $region23: #{tpu_custom_call.1} parent=1 // pred_check_branch
      %73 = sbr.rel (0) target = $region25
    $region24: #{tpu_custom_call.1} parent=1 // pred_region
      %75 = vsyncadd [#allocation3], 0
      %s77 = sshll.u32 [#allocation2], 4
      %s78 = int_to_ptr.vmem [resolvable:$true] %s77
      %s79 = sshll.u32 %s5, 4
      %s80 = int_to_ptr.hbm [resolvable:$true] %s79
      %82 = dma.vmem_to_hbm [thread:$0]  %s78, 128, %s80, [#allocation3]
    $region25: #{tpu_custom_call.1} parent=1 // pred_fallthru
      _
    // Predicated region
    $region26: #{tpu_custom_call.1} parent=1 // pred_check
      _
    $region27: #{tpu_custom_call.1} parent=1 // pred_check_branch
      %84 = sbr.rel (0) target = $region29
    $region28: #{tpu_custom_call.1} parent=1 // pred_region
      %86 = dma.done [#allocation3], 128
    $region29: #{tpu_custom_call.1} parent=1 // pred_fallthru
      _
    %87 = vsyncpa [#allocation3], 1

</llo_original>
